<compile_context>
chip_gen: v6e
topology: v6e:2x2x1
jax: 0.10.0
libtpu: 0.0.40
codegen_flags: <defaults>
</compile_context>

<pallas_src>
import jax
import jax.numpy as jnp
from jax.experimental import pallas as pl
from jax.experimental.pallas import tpu as pltpu

_LANES = 128  # lane width of a vreg; last dim of every block


def _fused_softmax_kernel(x_ref, o_ref):
    """Single-tile path: whole (padded) tensor resident in one VMEM block."""
    x = x_ref[...].astype(jnp.float32)
    c = jnp.max(x)                    # global max (padding is -inf, ignored)
    e = jnp.exp(x - c)                # -inf padding -> 0
    inv_s = 1.0 / jnp.sum(e)          # exact reciprocal, single scalar op
    o_ref[...] = (e * inv_s).astype(o_ref.dtype)


def _reduce_kernel(x_ref, c_ref, s_ref, m_acc, s_acc):
    """Pass A: online (rescaled) global max / sum(exp) across row-tiles."""
    i = pl.program_id(0)

    @pl.when(i == 0)
    def _():
        m_acc[...] = jnp.full_like(m_acc, -jnp.inf)
        s_acc[...] = jnp.zeros_like(s_acc)

    x = x_ref[...].astype(jnp.float32)            # per-tile upcast only
    m_old = m_acc[...]                            # (1, 1) running max
    m_new = jnp.maximum(m_old, jnp.max(x))        # (1, 1)
    # Rescale the running sum to the new max, then add this tile's share.
    s_acc[...] = (s_acc[...] * jnp.exp(m_old - m_new)
                  + jnp.sum(jnp.exp(x - m_new)))
    m_acc[...] = m_new

    @pl.when(i == pl.num_programs(0) - 1)
    def _():
        c_ref[...] = m_acc[...]
        s_ref[...] = s_acc[...]


def _normalize_kernel(c_ref, inv_s_ref, x_ref, o_ref):
    """Pass B: elementwise exp(x - c) * (1/s); embarrassingly parallel."""
    x = x_ref[...].astype(jnp.float32)
    o_ref[...] = (jnp.exp(x - c_ref[...]) * inv_s_ref[...]).astype(o_ref.dtype)


def softmax_stable(data: jax.Array, *, block_rows: int = 1024) -> jax.Array:
    """Numerically-stable softmax over the entire tensor (matches the module)."""
    orig_shape = data.shape
    orig_dtype = data.dtype

    flat = data.reshape(-1)
    n = flat.shape[0]

    # --- Sublane-dense 2-D layout: (rows_padded, 128), rows a multiple of 8.
    rows = (n + _LANES - 1) // _LANES
    rows8 = max(8, ((rows + 7) // 8) * 8)
    br = min(((block_rows + 7) // 8) * 8, rows8)      # rows per tile (mult of 8)
    rows_padded = ((rows8 + br - 1) // br) * br
    n_tiles = rows_padded // br

    pad = rows_padded * _LANES - n
    if pad:
        # -inf padding: ignored by the max, contributes exp(-inf)=0 to the sum.
        flat = jnp.pad(flat, (0, pad), constant_values=-jnp.inf)
    x2d = flat.reshape(rows_padded, _LANES)

    if n_tiles == 1:
        # Small/medium inputs: fused single pass, one HBM read of x.
        out2d = pl.pallas_call(
            _fused_softmax_kernel,
            out_shape=jax.ShapeDtypeStruct((rows_padded, _LANES), orig_dtype),
            grid_spec=pltpu.PrefetchScalarGridSpec(
                num_scalar_prefetch=0,
                grid=(1,),
                in_specs=[pl.BlockSpec((rows_padded, _LANES), lambda i: (0, 0))],
                out_specs=pl.BlockSpec((rows_padded, _LANES), lambda i: (0, 0)),
            ),
            compiler_params=pltpu.CompilerParams(
                dimension_semantics=("arbitrary",)),
        )(x2d)
    else:
        # --- Pass A: global max + sum(exp) with an online rescale across tiles.
        c, s = pl.pallas_call(
            _reduce_kernel,
            out_shape=(jax.ShapeDtypeStruct((1, 1), jnp.float32),
                       jax.ShapeDtypeStruct((1, 1), jnp.float32)),
            grid_spec=pltpu.PrefetchScalarGridSpec(
                num_scalar_prefetch=0,
                grid=(n_tiles,),
                in_specs=[pl.BlockSpec((br, _LANES), lambda i: (i, 0))],
                out_specs=(pl.BlockSpec((1, 1), lambda i: (0, 0)),
                           pl.BlockSpec((1, 1), lambda i: (0, 0))),
                scratch_shapes=[pltpu.VMEM((1, 1), jnp.float32),   # running max
                                pltpu.VMEM((1, 1), jnp.float32)],  # running sum
            ),
            compiler_params=pltpu.CompilerParams(
                dimension_semantics=("arbitrary",)),
        )(x2d)

        # Exact scalar reciprocal, hoisted once out of the per-tile loop.
        inv_s = 1.0 / s

        # --- Pass B: elementwise normalize; "parallel" lets v7x use both TCs.
        out2d = pl.pallas_call(
            _normalize_kernel,
            out_shape=jax.ShapeDtypeStruct((rows_padded, _LANES), orig_dtype),
            grid_spec=pltpu.PrefetchScalarGridSpec(
                num_scalar_prefetch=0,
                grid=(n_tiles,),
                in_specs=[pl.BlockSpec((1, 1), lambda i: (0, 0)),
                          pl.BlockSpec((1, 1), lambda i: (0, 0)),
                          pl.BlockSpec((br, _LANES), lambda i: (i, 0))],
                out_specs=pl.BlockSpec((br, _LANES), lambda i: (i, 0)),
            ),
            compiler_params=pltpu.CompilerParams(
                dimension_semantics=("parallel",)),
        )(c, inv_s, x2d)

    return out2d.reshape(-1)[:n].reshape(orig_shape)


if __name__ == "__main__":
    key = jax.random.PRNGKey(0)

    # 1) Small 1-D vector (what the module's per-index loop implies): seq=8.
    #    Exercises the fused single-tile path.
    x_small = jax.random.normal(key, (8,), dtype=jnp.float32)
    y_small = jax.block_until_ready(softmax_stable(x_small))

    c_ref = jnp.max(x_small)
    ref_small = jnp.exp(x_small - c_ref) / jnp.sum(jnp.exp(x_small - c_ref))
    assert y_small.shape == x_small.shape and y_small.dtype == x_small.dtype
    assert jnp.allclose(y_small, ref_small, atol=1e-6, rtol=1e-6)
    assert jnp.allclose(jnp.sum(y_small), 1.0, atol=1e-6)

    # 2) Exercise the tiled two-pass path: force multiple row-tiles by using a
    #    tiny block_rows so the test input stays small.
    x_multi = jax.random.normal(jax.random.PRNGKey(0), (3000,), dtype=jnp.float32)
    y_multi = jax.block_until_ready(softmax_stable(x_multi, block_rows=8))

    c2 = jnp.max(x_multi)
    ref_multi = jnp.exp(x_multi - c2) / jnp.sum(jnp.exp(x_multi - c2))
    assert y_multi.shape == x_multi.shape and y_multi.dtype == x_multi.dtype
    assert jnp.allclose(y_multi, ref_multi, atol=1e-6, rtol=1e-6)
    assert jnp.allclose(jnp.sum(y_multi), 1.0, atol=2e-6)

    print("KERNEL_OK")
</pallas_src>

<mosaic_0001>
module attributes {stable_mosaic.version = 11 : i64} {
  func.func @_fused_softmax_kernel(%arg0: i32, %arg1: memref<8x128xf32, #tpu.memory_space<vmem>>, %arg2: memref<8x128xf32, #tpu.memory_space<vmem>>) attributes {dimension_semantics = [#tpu.dimension_semantics<arbitrary>], iteration_bounds = array<i64: 1>, scalar_prefetch = 0 : i64, scratch_operands = 0 : i64, tpu.core_type = #tpu.core_type<tc>, window_params = [{pipeline_mode = #tpu.pipeline_mode<synchronous>, transform_indices = @transform_0, window_bounds = array<i64: 8, 128>}, {pipeline_mode = #tpu.pipeline_mode<synchronous>, transform_indices = @transform_1, window_bounds = array<i64: 8, 128>}]} {
    %c0 = arith.constant 0 : index
    %c0_0 = arith.constant 0 : index
    %0 = vector.load %arg1[%c0, %c0_0] : memref<8x128xf32, #tpu.memory_space<vmem>>, vector<8x128xf32>
    %1 = vector.shape_cast %0 : vector<8x128xf32> to vector<1x8x128xf32>
    %cst = arith.constant dense<0xFF800000> : vector<1xf32>
    %2 = vector.multi_reduction <maximumf>, %1, %cst [1, 2] : vector<1x8x128xf32> to vector<1xf32>
    %3 = vector.shape_cast %2 : vector<1xf32> to vector<1x1x1xf32>
    %4 = vector.extract %3[0, 0, 0] : f32 from vector<1x1x1xf32>
    %5 = vector.broadcast %4 : f32 to vector<8x128xf32>
    %6 = arith.subf %0, %5 : vector<8x128xf32>
    %7 = math.exp %6 : vector<8x128xf32>
    %8 = vector.shape_cast %7 : vector<8x128xf32> to vector<1x8x128xf32>
    %cst_1 = arith.constant dense<0.000000e+00> : vector<1xf32>
    %9 = vector.multi_reduction <add>, %8, %cst_1 [1, 2] : vector<1x8x128xf32> to vector<1xf32>
    %10 = vector.shape_cast %9 : vector<1xf32> to vector<1x1x1xf32>
    %11 = vector.extract %10[0, 0, 0] : f32 from vector<1x1x1xf32>
    %cst_2 = arith.constant 1.000000e+00 : f32
    %12 = arith.divf %cst_2, %11 : f32
    %13 = vector.broadcast %12 : f32 to vector<8x128xf32>
    %14 = arith.mulf %7, %13 : vector<8x128xf32>
    %c0_3 = arith.constant 0 : index
    %c0_4 = arith.constant 0 : index
    %15 = vector.load %arg2[%c0_3, %c0_4] : memref<8x128xf32, #tpu.memory_space<vmem>>, vector<8x128xf32>
    tpu.vector_store %arg2[%c0_3, %c0_4], %14 {strides = array<i32>} : memref<8x128xf32, #tpu.memory_space<vmem>>, vector<8x128xf32>,
    return
  }
  func.func @transform_0(%arg0: i32) -> (i32, i32) {
    %c0_i32 = arith.constant 0 : i32
    %c0_i32_0 = arith.constant 0 : i32
    %c0_i32_1 = arith.constant 0 : i32
    return %c0_i32, %c0_i32_0 : i32, i32
  }
  func.func @transform_1(%arg0: i32) -> (i32, i32) {
    %c0_i32 = arith.constant 0 : i32
    %c0_i32_0 = arith.constant 0 : i32
    %c0_i32_1 = arith.constant 0 : i32
    return %c0_i32, %c0_i32_0 : i32, i32
  }
}

</mosaic_0001>

<llo_original>
// kernel: tpu_custom_call.1
$region0: #{tpu_custom_call.1}
  #allocation0 [shape = 'u32[]', space=smem, size = 0x4, offset = 0x4, fixed_abs, tag = 'smem constant byte address 0x4 - core index']
  #allocation1 [shape = 'u32[144,128]{1,0:T(1,128)}', space=vmem, size = 0x12000, scoped, tag = 'internal scratch']
  %s0 = inlined_call_operand.hbm [shape: f32[8,128], index: 0, kind: input, shape index: {}]
  %s1 = inlined_call_operand.hbm [shape: f32[8,128], index: 1, kind: output, shape index: {}]
  %s2 = sld [smem:[#allocation0]]
  $region18: #{tpu_custom_call.1} parent=0
    _
  %s4 = ssub.s32 1, %s2
  %s5 = scalar_select 0, %s4, %s2
  $region1: #{tpu_custom_call.1} parent=0
    #allocation2 [shape = 'u8[4096]{0}', space=vmem, size = 0x1000, scoped, tag = 'input window, operand 0, single buffered']
    #allocation3 [shape = 's32[1]{0}', space=sflag, size = 0x4, scoped, tag = 'scoped memory for tpu_custom_call.1']
    #allocation4 [shape = 's32[1]{0}', space=sflag, size = 0x4, scoped, tag = 'scoped memory for tpu_custom_call.1']
    #allocation5 [shape = 'u8[4096]{0}', space=vmem, size = 0x1000, scoped, tag = 'output window, operand 0, single buffered']
    %6 = vsyncpa [#allocation3], 0
    %7 = vsyncpa [#allocation4], 0
    // Predicated region
    $region2: #{tpu_custom_call.1} parent=1 // pred_check
      _
    $region3: #{tpu_custom_call.1} parent=1 // pred_check_branch
      %9 = sbr.rel (0) target = $region5
    $region4: #{tpu_custom_call.1} parent=1 // pred_region
      %s11 = ssub.s32 128, 128
      %12 = vsyncadd [#allocation3], %s11
      %s14 = sshll.u32 [#allocation2], 4
      %s15 = int_to_ptr.vmem [resolvable:$true] %s14
      %17 = dma.hbm_to_vmem [thread:$0]  %s0, 128, %s15, [#allocation3]
    $region5: #{tpu_custom_call.1} parent=1 // pred_fallthru
      _
    // Predicated region
    $region6: #{tpu_custom_call.1} parent=1 // pred_check
      _
    $region7: #{tpu_custom_call.1} parent=1 // pred_check_branch
      %19 = sbr.rel (0) target = $region9
    $region8: #{tpu_custom_call.1} parent=1 // pred_region
      %20 = dma.done [#allocation3], 128
    $region9: #{tpu_custom_call.1} parent=1 // pred_fallthru
      _
    %v21 = vld [vmem:[#allocation2] sm:$0xff]
    %22 = vmax.xlane.f32.xlu0 %v21
    %v23 = vpop.xlane.xlu0 %22
    %v24 = vrot.slane %v23, 4
    %v25 = vmax.f32 %v23, %v24
    %v26 = vrot.slane %v25, 2
    %v27 = vmax.f32 %v25, %v26
    %v28 = vrot.slane %v27, 1
    %v29 = vmax.f32 %v27, %v28
    %s30 = vtos %v29
    %v31 = vstv %s30
    %v32 = vsub.f32 %v21, %v31
    %v33 = vmul.f32 %v32, 1.442695
    %v34 = vpow.pop %v33
    %35 = vadd.xlane.f32.xlu0 %v34
    %v36 = vpop.xlane.xlu0 %35
    %v37 = vrot.slane %v36, 4
    %v38 = vadd.f32 %v36, %v37
    %v39 = vrot.slane %v38, 2
    %v40 = vadd.f32 %v38, %v39
    %v41 = vrot.slane %v40, 1
    %v42 = vadd.f32 %v40, %v41
    %s43 = vtos %v42
    %v44 = vstv %s43
    %v45 = vrcp.pop %v44
    %s46 = vtos %v45
    %v47 = vstv %s46
    %v48 = vmul.f32 %v34, %v47
    %49 = vst [vmem:[#allocation5] sm:$0xff] %v48
    // Predicated region
    $region10: #{tpu_custom_call.1} parent=1 // pred_check
      _
    $region11: #{tpu_custom_call.1} parent=1 // pred_check_branch
      %51 = sbr.rel (0) target = $region13
    $region12: #{tpu_custom_call.1} parent=1 // pred_region
      %s53 = ssub.s32 128, 128
      %54 = vsyncadd [#allocation4], %s53
      %s56 = sshll.u32 [#allocation5], 4
      %s57 = int_to_ptr.vmem [resolvable:$true] %s56
      %59 = dma.vmem_to_hbm [thread:$0]  %s57, 128, %s1, [#allocation4]
    $region13: #{tpu_custom_call.1} parent=1 // pred_fallthru
      _
    // Predicated region
    $region14: #{tpu_custom_call.1} parent=1 // pred_check
      _
    $region15: #{tpu_custom_call.1} parent=1 // pred_check_branch
      %61 = sbr.rel (0) target = $region17
    $region16: #{tpu_custom_call.1} parent=1 // pred_region
      %62 = dma.done [#allocation4], 128
    $region17: #{tpu_custom_call.1} parent=1 // pred_fallthru
      _
    %63 = vsyncpa [#allocation3], 1
    %64 = vsyncpa [#allocation4], 1

</llo_original>
